<compile_context>
chip_gen: v7x
topology: tpu7x:2x2x1
jax: 0.10.0
libtpu: 0.0.40
codegen_flags: <defaults>
</compile_context>

<pallas_src>
import jax
import jax.numpy as jnp
from jax.experimental import pallas as pl
from jax.experimental.pallas import tpu as pltpu

# ---- hyperparameters (synthetic, small) -------------------------------------
BATCH_SIZE   = 8
MAX_SENT_LEN = 8
WORD_DIM     = 32
VOCAB_SIZE   = 20
CLASS_SIZE   = 4
FILTERS      = (3, 4, 5)
FILTER_NUM   = (16, 16, 16)
DROPOUT_PROB = 0.5      # eval-mode: identity
IN_CHANNEL   = 1

# ---- kernel-layout constants -------------------------------------------------
V_PAD    = 32                                 # vocab rows padded to a power of 2 (>= VOCAB+2)
ENC_DIM  = MAX_SENT_LEN * V_PAD               # 256: one-hot token-code width per sentence
N_PLANES = MAX_SENT_LEN - min(FILTERS) + 1    # 6: max #conv positions over all banks
FEAT_PAD = 128                                # conv feature lanes padded to a full vreg
OUT_PAD  = 128                                # logit lanes padded to a full vreg
NEG      = -1e30                              # additive mask for invalid (pos, bank) lanes

assert len(FILTERS) == len(FILTER_NUM)
assert V_PAD >= VOCAB_SIZE + 2 and (V_PAD & (V_PAD - 1)) == 0
assert sum(FILTER_NUM) <= FEAT_PAD and CLASS_SIZE <= OUT_PAD
assert N_PLANES % 2 == 0                      # chunked pooling walks planes in pairs


def cnn_kernel(ids_ref, wf_ref, cb_ref, fcw_ref, fcb_ref, out_ref):
    """Fused forward pass for one batch tile.

    ids_ref : (TB, L)              int32 token ids
    wf_ref  : (L*V_PAD, NP*128)    bf16 fused embedding+conv weight (mask folded in)
    cb_ref  : (1, 128)             f32  conv bias packed per bank lane (0 in padding)
    fcw_ref : (128, 128)           bf16 fc weight, zero-padded
    fcb_ref : (1, 128)             f32  fc bias, zero-padded
    out_ref : (TB, 128)            f32  logits (first CLASS_SIZE lanes are real)
    """
    tb = ids_ref.shape[0]
    enc = wf_ref.shape[0]

    # --- fused embedding lookup: build one-hot token codes on the VPU --------
    # One compare per word slot against the precomputed lane target, OR-reduce,
    # single cast to the matmul dtype at the end.
    ids = ids_ref[...]                                              # (TB, L) i32
    col = jax.lax.broadcasted_iota(jnp.int32, (tb, enc), 1)         # lane index
    hit = col == ids[:, 0:1]                                        # word slot 0
    for l in range(1, MAX_SENT_LEN):                                # static unroll (8)
        hit = hit | (col == (ids[:, l:l + 1] + l * V_PAD))
    onehot = hit.astype(jnp.bfloat16)                               # (TB, 256) bf16

    # --- conv banks x positions on the MXU, pooled incrementally --------------
    # Two 128-lane planes (256 MXU lanes) per matmul chunk; invalid (pos, bank)
    # lanes carry a -1e30 contribution folded into wf, so they never win the max.
    m = None
    for c0 in range(0, N_PLANES, 2):
        wf_chunk = wf_ref[:, c0 * FEAT_PAD:(c0 + 2) * FEAT_PAD]     # (256, 256) bf16
        s = jnp.dot(onehot, wf_chunk, preferred_element_type=jnp.float32)
        cm = jnp.maximum(s[:, :FEAT_PAD], s[:, FEAT_PAD:])          # (TB, 128)
        m = cm if m is None else jnp.maximum(m, cm)

    # conv bias + ReLU hoisted out of the pooling max (ReLU(s+b) monotone in s)
    feat = jnp.maximum(m + cb_ref[...], 0.0)                        # (TB, 128) f32

    # dropout -> identity (eval semantics)
    # TODO(synk): training-time dropout mask (pltpu.prng_*) intentionally omitted.
    out_ref[...] = (jnp.dot(feat.astype(jnp.bfloat16), fcw_ref[...],
                            preferred_element_type=jnp.float32) + fcb_ref[...])


def _round_up(x, m):
    return ((x + m - 1) // m) * m


def cnn_forward(inp, packed):
    """inp: (B, MAX_SENT_LEN) int token ids -> (B, CLASS_SIZE) f32 logits."""
    b = inp.shape[0]
    b_tile = min(512, _round_up(b, 8))           # large tiles amortize per-step overhead
    b_pad = _round_up(b, b_tile)
    ids = inp.astype(jnp.int32)
    if b_pad != b:                               # pad rows with padding_idx tokens
        ids = jnp.pad(ids, ((0, b_pad - b), (0, 0)), constant_values=VOCAB_SIZE + 1)
    ncol = N_PLANES * FEAT_PAD

    out = pl.pallas_call(
        cnn_kernel,
        out_shape=jax.ShapeDtypeStruct((b_pad, OUT_PAD), jnp.float32),
        grid=(b_pad // b_tile,),
        in_specs=[
            pl.BlockSpec((b_tile, MAX_SENT_LEN), lambda i: (i, 0)),   # ids: tiled over batch
            pl.BlockSpec((ENC_DIM, ncol), lambda i: (0, 0)),          # fused weight (resident)
            pl.BlockSpec((1, FEAT_PAD), lambda i: (0, 0)),            # conv bias
            pl.BlockSpec((FEAT_PAD, OUT_PAD), lambda i: (0, 0)),      # fc weight
            pl.BlockSpec((1, OUT_PAD), lambda i: (0, 0)),             # fc bias
        ],
        out_specs=pl.BlockSpec((b_tile, OUT_PAD), lambda i: (i, 0)),
        compiler_params=pltpu.CompilerParams(
            dimension_semantics=("parallel",)),   # batch tiles are independent
    )(ids, packed["w_fused"], packed["conv_bias"], packed["fc_w"], packed["fc_b"])
    # Toy-size convenience slice; large-batch consumers should take the padded
    # (B, 128) slab directly to avoid an extra full read+write in XLA.
    return out[:b, :CLASS_SIZE]


def init_params(key):
    """Parameters in (transposed-)PyTorch layouts, matching the original module."""
    keys = jax.random.split(key, 12)
    params = {}

    # Embedding (VOCAB+2, D); padding_idx = VOCAB+1 is a zero row.
    emb = 0.2 * jax.random.normal(keys[0], (VOCAB_SIZE + 2, WORD_DIM), jnp.float32)
    params["embedding"] = emb.at[VOCAB_SIZE + 1].set(0.0)

    # Conv1d weights: torch shape (FN, 1, F*D) -> stored (F*D, FN) for matmul.
    for k in range(len(FILTERS)):
        ksz = FILTERS[k] * WORD_DIM * IN_CHANNEL
        params[f"w{k}"] = 0.1 * jax.random.normal(
            keys[1 + 2 * k], (ksz, FILTER_NUM[k]), jnp.float32)
        params[f"b{k}"] = 0.1 * jax.random.normal(
            keys[2 + 2 * k], (1, FILTER_NUM[k]), jnp.float32)

    # Linear: torch (CLASS, sum_FN) -> stored transposed (sum_FN, CLASS).
    sum_fn = sum(FILTER_NUM)
    params["fc_w"] = 0.1 * jax.random.normal(keys[7], (sum_fn, CLASS_SIZE), jnp.float32)
    params["fc_b"] = 0.1 * jax.random.normal(keys[8], (1, CLASS_SIZE), jnp.float32)
    return params


def pack_params(params):
    """One-time host-side repack: fold the embedding (and the invalid-lane mask)
    into a zero-padded, position-shifted conv weight, pad everything to
    lane-dense 128-wide tiles, and cast matmul weights to bf16."""
    L, D = MAX_SENT_LEN, WORD_DIM
    ncol = N_PLANES * FEAT_PAD

    emb_pad = jnp.zeros((V_PAD, D), jnp.float32).at[:VOCAB_SIZE + 2].set(params["embedding"])

    w_big = jnp.zeros((L * D, ncol), jnp.float32)      # position-shifted conv weights
    pos_mask = jnp.full((1, ncol), NEG, jnp.float32)   # -inf on invalid (pos, bank) lanes
    conv_bias = jnp.zeros((1, FEAT_PAD), jnp.float32)
    off = 0
    for k, (fsz, fnum) in enumerate(zip(FILTERS, FILTER_NUM)):
        w = params[f"w{k}"]                            # (fsz*D, fnum)
        n_pos = L - fsz + 1
        for p in range(n_pos):
            rows = slice(p * D, p * D + fsz * D)
            cols = slice(p * FEAT_PAD + off, p * FEAT_PAD + off + fnum)
            w_big = w_big.at[rows, cols].set(w)
            pos_mask = pos_mask.at[0, cols].set(0.0)
        conv_bias = conv_bias.at[0, off:off + fnum].set(params[f"b{k}"][0])
        off += fnum

    # Fold the embedding lookup into the conv weight:
    #   W_fused[l*V_PAD + v, c] = sum_d emb[v, d] * w_big[l*D + d, c]
    w_fused = jnp.einsum("vd,ldc->lvc", emb_pad, w_big.reshape(L, D, ncol),
                         precision=jax.lax.Precision.HIGHEST)
    w_fused = w_fused.reshape(L * V_PAD, ncol)

    # Fold the invalid-lane mask into word-slot-0 rows: every one-hot row has
    # exactly one hit in rows [0, V_PAD), so each sentence picks up the -1e30
    # exactly once per invalid (pos, bank) column.
    w_fused = w_fused.at[:V_PAD, :].add(jnp.broadcast_to(pos_mask, (V_PAD, ncol)))
    w_fused = w_fused.astype(jnp.bfloat16)

    fc_w = jnp.zeros((FEAT_PAD, OUT_PAD), jnp.float32)
    fc_w = fc_w.at[:sum(FILTER_NUM), :CLASS_SIZE].set(params["fc_w"])
    fc_w = fc_w.astype(jnp.bfloat16)
    fc_b = jnp.zeros((1, OUT_PAD), jnp.float32).at[0, :CLASS_SIZE].set(params["fc_b"][0])
    return {"w_fused": w_fused, "conv_bias": conv_bias, "fc_w": fc_w, "fc_b": fc_b}


def cnn_reference(inp, params):
    """Pure-JAX transcription of the PyTorch forward (eval mode) for checking."""
    L, D = MAX_SENT_LEN, WORD_DIM
    x = params["embedding"][inp].reshape(inp.shape[0], L * D)
    feats = []
    for k, (fsz, fnum) in enumerate(zip(FILTERS, FILTER_NUM)):
        w, bias = params[f"w{k}"], params[f"b{k}"]
        cols = []
        for p in range(L - fsz + 1):
            win = x[:, p * D: p * D + fsz * D]
            cols.append(jnp.maximum(win @ w + bias, 0.0))
        feats.append(jnp.max(jnp.stack(cols, axis=1), axis=1))
    z = jnp.concatenate(feats, axis=1)
    return z @ params["fc_w"] + params["fc_b"]


if __name__ == "__main__":
    params = init_params(jax.random.PRNGKey(0))
    packed = pack_params(params)

    # Deterministic token ids in [0, VOCAB+1]; include padding tokens.
    inp = jax.random.randint(jax.random.PRNGKey(1),
                             (BATCH_SIZE, MAX_SENT_LEN), 0, VOCAB_SIZE, jnp.int32)
    inp = inp.at[:, -1].set(VOCAB_SIZE + 1)     # padding index in last slot

    logits = cnn_forward(inp, packed)
    jax.block_until_ready(logits)

    assert logits.shape == (BATCH_SIZE, CLASS_SIZE)
    assert logits.dtype == jnp.float32

    ref = cnn_reference(inp, params)
    err = float(jnp.max(jnp.abs(logits - ref)))
    assert err < 3e-2, f"kernel vs reference mismatch: max abs err = {err}"
    print("KERNEL_OK")
</pallas_src>

<mosaic_0001>
module attributes {stable_mosaic.version = 11 : i64} {
  func.func @cnn_kernel(%arg0: i32, %arg1: memref<8x8xi32, #tpu.memory_space<vmem>>, %arg2: memref<256x768xbf16, #tpu.memory_space<vmem>>, %arg3: memref<1x128xf32, #tpu.memory_space<vmem>>, %arg4: memref<128x128xbf16, #tpu.memory_space<vmem>>, %arg5: memref<1x128xf32, #tpu.memory_space<vmem>>, %arg6: memref<8x128xf32, #tpu.memory_space<vmem>>) attributes {dimension_semantics = [#tpu.dimension_semantics<parallel>], iteration_bounds = array<i64: 1>, scalar_prefetch = 0 : i64, scratch_operands = 0 : i64, tpu.core_type = #tpu.core_type<tc>, window_params = [{transform_indices = @transform_0, window_bounds = array<i64: 8, 8>}, {pipeline_mode = #tpu.pipeline_mode<synchronous>, transform_indices = @transform_1, window_bounds = array<i64: 256, 768>}, {pipeline_mode = #tpu.pipeline_mode<synchronous>, transform_indices = @transform_2, window_bounds = array<i64: 1, 128>}, {pipeline_mode = #tpu.pipeline_mode<synchronous>, transform_indices = @transform_3, window_bounds = array<i64: 128, 128>}, {pipeline_mode = #tpu.pipeline_mode<synchronous>, transform_indices = @transform_4, window_bounds = array<i64: 1, 128>}, {transform_indices = @transform_5, window_bounds = array<i64: 8, 128>}]} {
    %c0 = arith.constant 0 : index
    %c0_0 = arith.constant 0 : index
    %0 = vector.load %arg1[%c0, %c0_0] : memref<8x8xi32, #tpu.memory_space<vmem>>, vector<8x8xi32>
    %1 = tpu.iota {dimensions = array<i32: 1>} : vector<8x256xi32>
    %2 = vector.extract_strided_slice %0 {offsets = [0, 0], sizes = [8, 1], strides = [1, 1]} : vector<8x8xi32> to vector<8x1xi32>
    %3 = vector.broadcast %2 : vector<8x1xi32> to vector<8x256xi32>
    %4 = arith.cmpi eq, %1, %3 : vector<8x256xi32>
    %5 = vector.extract_strided_slice %0 {offsets = [0, 1], sizes = [8, 1], strides = [1, 1]} : vector<8x8xi32> to vector<8x1xi32>
    %c32_i32 = arith.constant 32 : i32
    %6 = vector.broadcast %c32_i32 : i32 to vector<8x1xi32>
    %7 = arith.addi %5, %6 : vector<8x1xi32>
    %8 = vector.broadcast %7 : vector<8x1xi32> to vector<8x256xi32>
    %9 = arith.cmpi eq, %1, %8 : vector<8x256xi32>
    %10 = arith.ori %4, %9 : vector<8x256xi1>
    %11 = vector.extract_strided_slice %0 {offsets = [0, 2], sizes = [8, 1], strides = [1, 1]} : vector<8x8xi32> to vector<8x1xi32>
    %c64_i32 = arith.constant 64 : i32
    %12 = vector.broadcast %c64_i32 : i32 to vector<8x1xi32>
    %13 = arith.addi %11, %12 : vector<8x1xi32>
    %14 = vector.broadcast %13 : vector<8x1xi32> to vector<8x256xi32>
    %15 = arith.cmpi eq, %1, %14 : vector<8x256xi32>
    %16 = arith.ori %10, %15 : vector<8x256xi1>
    %17 = vector.extract_strided_slice %0 {offsets = [0, 3], sizes = [8, 1], strides = [1, 1]} : vector<8x8xi32> to vector<8x1xi32>
    %c96_i32 = arith.constant 96 : i32
    %18 = vector.broadcast %c96_i32 : i32 to vector<8x1xi32>
    %19 = arith.addi %17, %18 : vector<8x1xi32>
    %20 = vector.broadcast %19 : vector<8x1xi32> to vector<8x256xi32>
    %21 = arith.cmpi eq, %1, %20 : vector<8x256xi32>
    %22 = arith.ori %16, %21 : vector<8x256xi1>
    %23 = vector.extract_strided_slice %0 {offsets = [0, 4], sizes = [8, 1], strides = [1, 1]} : vector<8x8xi32> to vector<8x1xi32>
    %c128_i32 = arith.constant 128 : i32
    %24 = vector.broadcast %c128_i32 : i32 to vector<8x1xi32>
    %25 = arith.addi %23, %24 : vector<8x1xi32>
    %26 = vector.broadcast %25 : vector<8x1xi32> to vector<8x256xi32>
    %27 = arith.cmpi eq, %1, %26 : vector<8x256xi32>
    %28 = arith.ori %22, %27 : vector<8x256xi1>
    %29 = vector.extract_strided_slice %0 {offsets = [0, 5], sizes = [8, 1], strides = [1, 1]} : vector<8x8xi32> to vector<8x1xi32>
    %c160_i32 = arith.constant 160 : i32
    %30 = vector.broadcast %c160_i32 : i32 to vector<8x1xi32>
    %31 = arith.addi %29, %30 : vector<8x1xi32>
    %32 = vector.broadcast %31 : vector<8x1xi32> to vector<8x256xi32>
    %33 = arith.cmpi eq, %1, %32 : vector<8x256xi32>
    %34 = arith.ori %28, %33 : vector<8x256xi1>
    %35 = vector.extract_strided_slice %0 {offsets = [0, 6], sizes = [8, 1], strides = [1, 1]} : vector<8x8xi32> to vector<8x1xi32>
    %c192_i32 = arith.constant 192 : i32
    %36 = vector.broadcast %c192_i32 : i32 to vector<8x1xi32>
    %37 = arith.addi %35, %36 : vector<8x1xi32>
    %38 = vector.broadcast %37 : vector<8x1xi32> to vector<8x256xi32>
    %39 = arith.cmpi eq, %1, %38 : vector<8x256xi32>
    %40 = arith.ori %34, %39 : vector<8x256xi1>
    %41 = vector.extract_strided_slice %0 {offsets = [0, 7], sizes = [8, 1], strides = [1, 1]} : vector<8x8xi32> to vector<8x1xi32>
    %c224_i32 = arith.constant 224 : i32
    %42 = vector.broadcast %c224_i32 : i32 to vector<8x1xi32>
    %43 = arith.addi %41, %42 : vector<8x1xi32>
    %44 = vector.broadcast %43 : vector<8x1xi32> to vector<8x256xi32>
    %45 = arith.cmpi eq, %1, %44 : vector<8x256xi32>
    %46 = arith.ori %40, %45 : vector<8x256xi1>
    %47 = arith.extui %46 : vector<8x256xi1> to vector<8x256xi32>
    %48 = arith.sitofp %47 : vector<8x256xi32> to vector<8x256xf32>
    %49 = arith.truncf %48 : vector<8x256xf32> to vector<8x256xbf16>
    %c0_1 = arith.constant 0 : index
    %c0_2 = arith.constant 0 : index
    %50 = vector.load %arg2[%c0_1, %c0_2] : memref<256x768xbf16, #tpu.memory_space<vmem>>, vector<256x256xbf16>
    %cst = arith.constant dense<0.000000e+00> : vector<8x256xf32>
    %51 = tpu.matmul %49, %50, %cst {dimension_numbers = #tpu.dot_dimension_numbers<[1], [0], [0], [1], [0, 0, 1, 1], [], []>} : vector<8x256xbf16>, vector<256x256xbf16>, vector<8x256xf32> -> vector<8x256xf32>
    %52 = vector.extract_strided_slice %51 {offsets = [0, 0], sizes = [8, 128], strides = [1, 1]} : vector<8x256xf32> to vector<8x128xf32>
    %53 = vector.extract_strided_slice %51 {offsets = [0, 128], sizes = [8, 128], strides = [1, 1]} : vector<8x256xf32> to vector<8x128xf32>
    %54 = arith.maximumf %52, %53 : vector<8x128xf32>
    %c0_3 = arith.constant 0 : index
    %c256 = arith.constant 256 : index
    %55 = vector.load %arg2[%c0_3, %c256] : memref<256x768xbf16, #tpu.memory_space<vmem>>, vector<256x256xbf16>
    %cst_4 = arith.constant dense<0.000000e+00> : vector<8x256xf32>
    %56 = tpu.matmul %49, %55, %cst_4 {dimension_numbers = #tpu.dot_dimension_numbers<[1], [0], [0], [1], [0, 0, 1, 1], [], []>} : vector<8x256xbf16>, vector<256x256xbf16>, vector<8x256xf32> -> vector<8x256xf32>
    %57 = vector.extract_strided_slice %56 {offsets = [0, 0], sizes = [8, 128], strides = [1, 1]} : vector<8x256xf32> to vector<8x128xf32>
    %58 = vector.extract_strided_slice %56 {offsets = [0, 128], sizes = [8, 128], strides = [1, 1]} : vector<8x256xf32> to vector<8x128xf32>
    %59 = arith.maximumf %57, %58 : vector<8x128xf32>
    %60 = arith.maximumf %54, %59 : vector<8x128xf32>
    %c0_5 = arith.constant 0 : index
    %c512 = arith.constant 512 : index
    %61 = vector.load %arg2[%c0_5, %c512] : memref<256x768xbf16, #tpu.memory_space<vmem>>, vector<256x256xbf16>
    %cst_6 = arith.constant dense<0.000000e+00> : vector<8x256xf32>
    %62 = tpu.matmul %49, %61, %cst_6 {dimension_numbers = #tpu.dot_dimension_numbers<[1], [0], [0], [1], [0, 0, 1, 1], [], []>} : vector<8x256xbf16>, vector<256x256xbf16>, vector<8x256xf32> -> vector<8x256xf32>
    %63 = vector.extract_strided_slice %62 {offsets = [0, 0], sizes = [8, 128], strides = [1, 1]} : vector<8x256xf32> to vector<8x128xf32>
    %64 = vector.extract_strided_slice %62 {offsets = [0, 128], sizes = [8, 128], strides = [1, 1]} : vector<8x256xf32> to vector<8x128xf32>
    %65 = arith.maximumf %63, %64 : vector<8x128xf32>
    %66 = arith.maximumf %60, %65 : vector<8x128xf32>
    %c0_7 = arith.constant 0 : index
    %c0_8 = arith.constant 0 : index
    %67 = vector.load %arg3[%c0_7, %c0_8] : memref<1x128xf32, #tpu.memory_space<vmem>>, vector<1x128xf32>
    %68 = vector.broadcast %67 : vector<1x128xf32> to vector<8x128xf32>
    %69 = arith.addf %66, %68 : vector<8x128xf32>
    %cst_9 = arith.constant 0.000000e+00 : f32
    %70 = vector.broadcast %cst_9 : f32 to vector<8x128xf32>
    %71 = arith.maximumf %69, %70 : vector<8x128xf32>
    %72 = arith.truncf %71 : vector<8x128xf32> to vector<8x128xbf16>
    %c0_10 = arith.constant 0 : index
    %c0_11 = arith.constant 0 : index
    %73 = vector.load %arg4[%c0_10, %c0_11] : memref<128x128xbf16, #tpu.memory_space<vmem>>, vector<128x128xbf16>
    %cst_12 = arith.constant dense<0.000000e+00> : vector<8x128xf32>
    %74 = tpu.matmul %72, %73, %cst_12 {dimension_numbers = #tpu.dot_dimension_numbers<[1], [0], [0], [1], [0, 0, 1, 1], [], []>} : vector<8x128xbf16>, vector<128x128xbf16>, vector<8x128xf32> -> vector<8x128xf32>
    %c0_13 = arith.constant 0 : index
    %c0_14 = arith.constant 0 : index
    %75 = vector.load %arg5[%c0_13, %c0_14] : memref<1x128xf32, #tpu.memory_space<vmem>>, vector<1x128xf32>
    %76 = vector.broadcast %75 : vector<1x128xf32> to vector<8x128xf32>
    %77 = arith.addf %74, %76 : vector<8x128xf32>
    %c0_15 = arith.constant 0 : index
    %c0_16 = arith.constant 0 : index
    %78 = vector.load %arg6[%c0_15, %c0_16] : memref<8x128xf32, #tpu.memory_space<vmem>>, vector<8x128xf32>
    tpu.vector_store %arg6[%c0_15, %c0_16], %77 {strides = array<i32>} : memref<8x128xf32, #tpu.memory_space<vmem>>, vector<8x128xf32>,
    return
  }
  func.func @transform_0(%arg0: i32) -> (i32, i32) {
    %c0_i32 = arith.constant 0 : i32
    %c0_i32_0 = arith.constant 0 : i32
    return %arg0, %c0_i32 : i32, i32
  }
  func.func @transform_1(%arg0: i32) -> (i32, i32) {
    %c0_i32 = arith.constant 0 : i32
    %c0_i32_0 = arith.constant 0 : i32
    %c0_i32_1 = arith.constant 0 : i32
    return %c0_i32, %c0_i32_0 : i32, i32
  }
  func.func @transform_2(%arg0: i32) -> (i32, i32) {
    %c0_i32 = arith.constant 0 : i32
    %c0_i32_0 = arith.constant 0 : i32
    %c0_i32_1 = arith.constant 0 : i32
    return %c0_i32, %c0_i32_0 : i32, i32
  }
  func.func @transform_3(%arg0: i32) -> (i32, i32) {
    %c0_i32 = arith.constant 0 : i32
    %c0_i32_0 = arith.constant 0 : i32
    %c0_i32_1 = arith.constant 0 : i32
    return %c0_i32, %c0_i32_0 : i32, i32
  }
  func.func @transform_4(%arg0: i32) -> (i32, i32) {
    %c0_i32 = arith.constant 0 : i32
    %c0_i32_0 = arith.constant 0 : i32
    %c0_i32_1 = arith.constant 0 : i32
    return %c0_i32, %c0_i32_0 : i32, i32
  }
  func.func @transform_5(%arg0: i32) -> (i32, i32) {
    %c0_i32 = arith.constant 0 : i32
    %c0_i32_0 = arith.constant 0 : i32
    return %arg0, %c0_i32 : i32, i32
  }
}

</mosaic_0001>

<llo_original>
// kernel: tpu_custom_call.1
$region0: #{tpu_custom_call.1}
  #allocation0 [shape = 'u32[]', space=smem, size = 0x4, offset = 0x4, fixed_abs, tag = 'smem constant byte address 0x4 - core index']
  #allocation1 [shape = 'u32[144,128]{1,0:T(1,128)}', space=vmem, size = 0x12000, scoped, tag = 'internal scratch']
  %s0 = inlined_call_operand.hbm [shape: s32[8,8], index: 0, kind: input, shape index: {}]
  %s1 = inlined_call_operand.hbm [shape: bf16[256,768], index: 1, kind: input, shape index: {}]
  %s2 = inlined_call_operand.vmem [shape: f32[1,128], index: 2, kind: input, shape index: {}]
  %s3 = inlined_call_operand.hbm [shape: bf16[128,128], index: 3, kind: input, shape index: {}]
  %s4 = inlined_call_operand.vmem [shape: f32[1,128], index: 4, kind: input, shape index: {}]
  %s5 = inlined_call_operand.hbm [shape: f32[8,128], index: 5, kind: output, shape index: {}]
  %s6 = sld [smem:[#allocation0]]
  $region42: #{tpu_custom_call.1} parent=0
    _
  %s8 = ssub.s32 1, %s6
  %s9 = scalar_select 0, %s8, %s6
  $region1: #{tpu_custom_call.1} parent=0
    #allocation2 [shape = 'u8[4096]{0}', space=vmem, size = 0x1000, scoped, tag = 'input window, operand 0, single buffered']
    #allocation3 [shape = 's32[1]{0}', space=sflag, size = 0x4, scoped, tag = 'scoped memory for tpu_custom_call.1']
    #allocation4 [shape = 's32[1]{0}', space=sflag, size = 0x4, scoped, tag = 'scoped memory for tpu_custom_call.1']
    #allocation5 [shape = 'u8[393216]{0}', space=vmem, size = 0x60000, scoped, tag = 'input window, operand 1, single buffered']
    #allocation6 [shape = 's32[1]{0}', space=sflag, size = 0x4, scoped, tag = 'scoped memory for tpu_custom_call.1']
    #allocation7 [shape = 'u8[32768]{0}', space=vmem, size = 0x8000, scoped, tag = 'input window, operand 3, single buffered']
    #allocation8 [shape = 'u8[4096]{0}', space=vmem, size = 0x1000, scoped, tag = 'output window, operand 0, single buffered']
    %10 = vsyncpa [#allocation3], 0
    %11 = vsyncpa [#allocation6], 0
    %12 = vsyncpa [#allocation4], 0
    // Predicated region
    $region2: #{tpu_custom_call.1} parent=1 // pred_check
      _
    $region3: #{tpu_custom_call.1} parent=1 // pred_check_branch
      %14 = sbr.rel (0) target = $region5
    $region4: #{tpu_custom_call.1} parent=1 // pred_region
      %s16 = ssub.s32 128, 128
      %17 = vsyncadd [#allocation3], %s16
      %s19 = sshll.u32 [#allocation2], 4
      %s20 = int_to_ptr.vmem [resolvable:$true] %s19
      %22 = dma.hbm_to_vmem [thread:$0]  %s0, 128, %s20, [#allocation3]
    $region5: #{tpu_custom_call.1} parent=1 // pred_fallthru
      _
    // Predicated region
    $region6: #{tpu_custom_call.1} parent=1 // pred_check
      _
    $region7: #{tpu_custom_call.1} parent=1 // pred_check_branch
      %24 = sbr.rel (0) target = $region9
    $region8: #{tpu_custom_call.1} parent=1 // pred_region
      %s26 = ssub.s32 12288, 12288
      %27 = vsyncadd [#allocation6], %s26
      %s28 = sshll.u32 [#allocation5], 4
      %s29 = int_to_ptr.vmem [resolvable:$true] %s28
      %34 = dma.hbm_to_vmem [thread:$0]  %s1, 12288, %s29, [#allocation6], 384, 384, 24
    $region9: #{tpu_custom_call.1} parent=1 // pred_fallthru
      _
    // Predicated region
    $region10: #{tpu_custom_call.1} parent=1 // pred_check
      _
    $region11: #{tpu_custom_call.1} parent=1 // pred_check_branch
      %36 = sbr.rel (0) target = $region13
    $region12: #{tpu_custom_call.1} parent=1 // pred_region
      _
    $region13: #{tpu_custom_call.1} parent=1 // pred_fallthru
      _
    // Predicated region
    $region14: #{tpu_custom_call.1} parent=1 // pred_check
      _
    $region15: #{tpu_custom_call.1} parent=1 // pred_check_branch
      %38 = sbr.rel (0) target = $region17
    $region16: #{tpu_custom_call.1} parent=1 // pred_region
      %s40 = ssub.s32 1024, 1024
      %41 = vsyncadd [#allocation6], %s40
      %s42 = sshll.u32 [#allocation7], 4
      %s43 = int_to_ptr.vmem [resolvable:$true] %s42
      %48 = dma.hbm_to_vmem [thread:$0]  %s3, 1024, %s43, [#allocation6], 64, 64, 4
    $region17: #{tpu_custom_call.1} parent=1 // pred_fallthru
      _
    // Predicated region
    $region18: #{tpu_custom_call.1} parent=1 // pred_check
      _
    $region19: #{tpu_custom_call.1} parent=1 // pred_check_branch
      %50 = sbr.rel (0) target = $region21
    $region20: #{tpu_custom_call.1} parent=1 // pred_region
      _
    $region21: #{tpu_custom_call.1} parent=1 // pred_fallthru
      _
    // Predicated region
    $region22: #{tpu_custom_call.1} parent=1 // pred_check
      _
    $region23: #{tpu_custom_call.1} parent=1 // pred_check_branch
      %52 = sbr.rel (0) target = $region25
    $region24: #{tpu_custom_call.1} parent=1 // pred_region
      %53 = dma.done [#allocation3], 128
    $region25: #{tpu_custom_call.1} parent=1 // pred_fallthru
      _
    // Predicated region
    $region26: #{tpu_custom_call.1} parent=1 // pred_check
      _
    $region27: #{tpu_custom_call.1} parent=1 // pred_check_branch
      %55 = sbr.rel (0) target = $region29
    $region28: #{tpu_custom_call.1} parent=1 // pred_region
      %56 = dma.done [#allocation6], 12288
    $region29: #{tpu_custom_call.1} parent=1 // pred_fallthru
      _
    // Predicated region
    $region30: #{tpu_custom_call.1} parent=1 // pred_check
      _
    $region31: #{tpu_custom_call.1} parent=1 // pred_check_branch
      %58 = sbr.rel (0) target = $region33
    $region32: #{tpu_custom_call.1} parent=1 // pred_region
      %59 = dma.done [#allocation6], 1024
    $region33: #{tpu_custom_call.1} parent=1 // pred_fallthru
      _
    %v61 = vld [vmem:[#allocation2] sm:$0xff]
    %v62 = vlaneseq
    %v63 = vand.u32 %v62, 127
    %v64 = vadd.s32 %v63, 128
    %65 = vset.pattern.permute.xlu0 0
    %66 = vperm.xlu0 %65, %v61
    %v67 = vpop.permute.xlu0 %66
    %vm68 = vcmp.eq.s32.totalorder %v63, %v67
    %vm69 = vcmp.eq.s32.totalorder %v64, %v67
    %v70 = vadd.s32 %v61, 32
    %71 = vset.pattern.permute.xlu0 1
    %72 = vperm.xlu0 %71, %v70
    %v73 = vpop.permute.xlu0 %72
    %vm74 = vcmp.eq.s32.totalorder %v63, %v73
    %vm75 = vcmp.eq.s32.totalorder %v64, %v73
    %vm76 = vmor %vm68, %vm74
    %vm77 = vmor %vm69, %vm75
    %v78 = vadd.s32 %v61, 64
    %79 = vset.pattern.permute.xlu0 2
    %80 = vperm.xlu0 %79, %v78
    %v81 = vpop.permute.xlu0 %80
    %vm82 = vcmp.eq.s32.totalorder %v63, %v81
    %vm83 = vcmp.eq.s32.totalorder %v64, %v81
    %vm84 = vmor %vm76, %vm82
    %vm85 = vmor %vm77, %vm83
    %v86 = vadd.s32 %v61, 96
    %87 = vset.pattern.permute.xlu0 3
    %88 = vperm.xlu0 %87, %v86
    %v89 = vpop.permute.xlu0 %88
    %vm90 = vcmp.eq.s32.totalorder %v63, %v89
    %vm91 = vcmp.eq.s32.totalorder %v64, %v89
    %vm92 = vmor %vm84, %vm90
    %vm93 = vmor %vm85, %vm91
    %v94 = vadd.s32 %v61, 128
    %95 = vset.pattern.permute.xlu0 4
    %96 = vperm.xlu0 %95, %v94
    %v97 = vpop.permute.xlu0 %96
    %vm98 = vcmp.eq.s32.totalorder %v63, %v97
    %vm99 = vcmp.eq.s32.totalorder %v64, %v97
    %vm100 = vmor %vm92, %vm98
    %vm101 = vmor %vm93, %vm99
    %v102 = vadd.s32 %v61, 160
    %103 = vset.pattern.permute.xlu0 5
    %104 = vperm.xlu0 %103, %v102
    %v105 = vpop.permute.xlu0 %104
    %vm106 = vcmp.eq.s32.totalorder %v63, %v105
    %vm107 = vcmp.eq.s32.totalorder %v64, %v105
    %vm108 = vmor %vm100, %vm106
    %vm109 = vmor %vm101, %vm107
    %v110 = vadd.s32 %v61, 192
    %111 = vset.pattern.permute.xlu0 6
    %112 = vperm.xlu0 %111, %v110
    %v113 = vpop.permute.xlu0 %112
    %vm114 = vcmp.eq.s32.totalorder %v63, %v113
    %vm115 = vcmp.eq.s32.totalorder %v64, %v113
    %vm116 = vmor %vm108, %vm114
    %vm117 = vmor %vm109, %vm115
    %v118 = vadd.s32 %v61, 224
    %119 = vset.pattern.permute.xlu0 7
    %120 = vperm.xlu0 %119, %v118
    %v121 = vpop.permute.xlu0 %120
    %vm122 = vcmp.eq.s32.totalorder %v63, %v121
    %vm123 = vcmp.eq.s32.totalorder %v64, %v121
    %vm124 = vmor %vm116, %vm122
    %vm125 = vmor %vm117, %vm123
    %v126 = vsel %vm124, 1, 0
    %v127 = vsel %vm125, 1, 0
    %v128 = vcvt.s32.f32 %v126
    %v129 = vcvt.s32.f32 %v127
    %v130 = vpack.c.bf16 %v128, %v128
    %v131 = vpack.c.bf16 %v129, %v129
    %v132 = vld [vmem:[#allocation5] sm:$0xff]
    %v133 = vld [vmem:[#allocation5 + $0x18] sm:$0xff]
    %v134 = vld [vmem:[#allocation5 + $0x30] sm:$0xff]
    %v135 = vld [vmem:[#allocation5 + $0x48] sm:$0xff]
    %v136 = vld [vmem:[#allocation5 + $0x60] sm:$0xff]
    %v137 = vld [vmem:[#allocation5 + $0x78] sm:$0xff]
    %v138 = vld [vmem:[#allocation5 + $0x90] sm:$0xff]
    %v139 = vld [vmem:[#allocation5 + $0xa8] sm:$0xff]
    %v140 = vld [vmem:[#allocation5 + $0xc0] sm:$0xff]
    %v141 = vld [vmem:[#allocation5 + $0xd8] sm:$0xff]
    %v142 = vld [vmem:[#allocation5 + $0xf0] sm:$0xff]
    %v143 = vld [vmem:[#allocation5 + $0x108] sm:$0xff]
    %v144 = vld [vmem:[#allocation5 + $0x120] sm:$0xff]
    %v145 = vld [vmem:[#allocation5 + $0x138] sm:$0xff]
    %v146 = vld [vmem:[#allocation5 + $0x150] sm:$0xff]
    %v147 = vld [vmem:[#allocation5 + $0x168] sm:$0xff]
    %v148 = vld [vmem:[#allocation5 + $0x180] sm:$0xff]
    %v149 = vld [vmem:[#allocation5 + $0x198] sm:$0xff]
    %v150 = vld [vmem:[#allocation5 + $0x1b0] sm:$0xff]
    %v151 = vld [vmem:[#allocation5 + $0x1c8] sm:$0xff]
    %v152 = vld [vmem:[#allocation5 + $0x1e0] sm:$0xff]
    %v153 = vld [vmem:[#allocation5 + $0x1f8] sm:$0xff]
    %v154 = vld [vmem:[#allocation5 + $0x210] sm:$0xff]
    %v155 = vld [vmem:[#allocation5 + $0x228] sm:$0xff]
    %v156 = vld [vmem:[#allocation5 + $0x240] sm:$0xff]
    %v157 = vld [vmem:[#allocation5 + $0x258] sm:$0xff]
    %v158 = vld [vmem:[#allocation5 + $0x270] sm:$0xff]
    %v159 = vld [vmem:[#allocation5 + $0x288] sm:$0xff]
    %v160 = vld [vmem:[#allocation5 + $0x2a0] sm:$0xff]
    %v161 = vld [vmem:[#allocation5 + $0x2b8] sm:$0xff]
    %v162 = vld [vmem:[#allocation5 + $0x2d0] sm:$0xff]
    %v163 = vld [vmem:[#allocation5 + $0x2e8] sm:$0xff]
    %v196 = vunpack.c.l.b16 %v132
    %v197 = vunpack.c.h.b16 %v132
    %v198 = vunpack.c.l.b16 %v133
    %v199 = vunpack.c.h.b16 %v133
    %v200 = vunpack.c.l.b16 %v134
    %v201 = vunpack.c.h.b16 %v134
    %v202 = vunpack.c.l.b16 %v135
    %v203 = vunpack.c.h.b16 %v135
    %v204 = vunpack.c.l.b16 %v136
    %v205 = vunpack.c.h.b16 %v136
    %v206 = vunpack.c.l.b16 %v137
    %v207 = vunpack.c.h.b16 %v137
    %v208 = vunpack.c.l.b16 %v138
    %v209 = vunpack.c.h.b16 %v138
    %v210 = vunpack.c.l.b16 %v139
    %v211 = vunpack.c.h.b16 %v139
    %v212 = vunpack.c.l.b16 %v140
    %v213 = vunpack.c.h.b16 %v140
    %v214 = vunpack.c.l.b16 %v141
    %v215 = vunpack.c.h.b16 %v141
    %v216 = vunpack.c.l.b16 %v142
    %v217 = vunpack.c.h.b16 %v142
    %v218 = vunpack.c.l.b16 %v143
    %v219 = vunpack.c.h.b16 %v143
    %v220 = vunpack.c.l.b16 %v144
    %v221 = vunpack.c.h.b16 %v144
    %v222 = vunpack.c.l.b16 %v145
    %v223 = vunpack.c.h.b16 %v145
    %v224 = vunpack.c.l.b16 %v146
    %v225 = vunpack.c.h.b16 %v146
    %v226 = vunpack.c.l.b16 %v147
    %v227 = vunpack.c.h.b16 %v147
    %v228 = vunpack.c.l.b16 %v148
    %v229 = vunpack.c.h.b16 %v148
    %v230 = vunpack.c.l.b16 %v149
    %v231 = vunpack.c.h.b16 %v149
    %v232 = vunpack.c.l.b16 %v150
    %v233 = vunpack.c.h.b16 %v150
    %v234 = vunpack.c.l.b16 %v151
    %v235 = vunpack.c.h.b16 %v151
    %v236 = vunpack.c.l.b16 %v152
    %v237 = vunpack.c.h.b16 %v152
    %v238 = vunpack.c.l.b16 %v153
    %v239 = vunpack.c.h.b16 %v153
    %v240 = vunpack.c.l.b16 %v154
    %v241 = vunpack.c.h.b16 %v154
    %v242 = vunpack.c.l.b16 %v155
    %v243 = vunpack.c.h.b16 %v155
    %v244 = vunpack.c.l.b16 %v156
    %v245 = vunpack.c.h.b16 %v156
    %v246 = vunpack.c.l.b16 %v157
    %v247 = vunpack.c.h.b16 %v157
    %v248 = vunpack.c.l.b16 %v158
    %v249 = vunpack.c.h.b16 %v158
    %v250 = vunpack.c.l.b16 %v159
    %v251 = vunpack.c.h.b16 %v159
    %v252 = vunpack.c.l.b16 %v160
    %v253 = vunpack.c.h.b16 %v160
    %v254 = vunpack.c.l.b16 %v161
    %v255 = vunpack.c.h.b16 %v161
    %v256 = vunpack.c.l.b16 %v162
    %v257 = vunpack.c.h.b16 %v162
    %v258 = vunpack.c.l.b16 %v163
    %v259 = vunpack.c.h.b16 %v163
    %v260 = vpack.c.b16 %v198, %v196
    %v261 = vpack.c.b16 %v199, %v197
    %v262 = vpack.c.b16 %v202, %v200
    %v263 = vpack.c.b16 %v203, %v201
    %v264 = vpack.c.b16 %v206, %v204
    %v265 = vpack.c.b16 %v207, %v205
    %v266 = vpack.c.b16 %v210, %v208
    %v267 = vpack.c.b16 %v211, %v209
    %v268 = vpack.c.b16 %v214, %v212
    %v269 = vpack.c.b16 %v215, %v213
    %v270 = vpack.c.b16 %v218, %v216
    %v271 = vpack.c.b16 %v219, %v217
    %v272 = vpack.c.b16 %v222, %v220
    %v273 = vpack.c.b16 %v223, %v221
    %v274 = vpack.c.b16 %v226, %v224
    %v275 = vpack.c.b16 %v227, %v225
    %v276 = vpack.c.b16 %v230, %v228
    %v277 = vpack.c.b16 %v231, %v229
    %v278 = vpack.c.b16 %v234, %v232
    %v279 = vpack.c.b16 %v235, %v233
    %v280 = vpack.c.b16 %v238, %v236
    %v281 = vpack.c.b16 %v239, %v237
    %v282 = vpack.c.b16 %v242, %v240
    %v283 = vpack.c.b16 %v243, %v241
    %v284 = vpack.c.b16 %v246, %v244
    %v285 = vpack.c.b16 %v247, %v245
    %v286 = vpack.c.b16 %v250, %v248
    %v287 = vpack.c.b16 %v251, %v249
    %v288 = vpack.c.b16 %v254, %v252
    %v289 = vpack.c.b16 %v255, %v253
    %v290 = vpack.c.b16 %v258, %v256
    %v291 = vpack.c.b16 %v259, %v257
    %324 = vmatprep.subr.bf16.mxu0 %v261
    %325 = vmatpush1.bf16.msra.mxu0 %v260
    %326 = vmatprep.subr.bf16.mxu0 %v263
    %327 = vmatpush1.bf16.msra.mxu0 %v262
    %328 = vmatprep.subr.bf16.mxu0 %v265
    %329 = vmatpush1.bf16.msra.mxu0 %v264
    %330 = vmatprep.subr.bf16.mxu0 %v267
    %331 = vmatpush1.bf16.msra.mxu0 %v266
    %332 = vmatprep.subr.bf16.mxu0 %v269
    %333 = vmatpush1.bf16.msra.mxu0 %v268
    %334 = vmatprep.subr.bf16.mxu0 %v271
    %335 = vmatpush1.bf16.msra.mxu0 %v270
    %336 = vmatprep.subr.bf16.mxu0 %v273
    %337 = vmatpush1.bf16.msra.mxu0 %v272
    %338 = vmatprep.subr.bf16.mxu0 %v275
    %339 = vmatpush1.bf16.msra.mxu0 %v274
    %340 = vmatprep.subr.bf16.mxu0 %v277
    %341 = vmatpush1.bf16.msra.mxu0 %v276
    %342 = vmatprep.subr.bf16.mxu0 %v279
    %343 = vmatpush1.bf16.msra.mxu0 %v278
    %344 = vmatprep.subr.bf16.mxu0 %v281
    %345 = vmatpush1.bf16.msra.mxu0 %v280
    %346 = vmatprep.subr.bf16.mxu0 %v283
    %347 = vmatpush1.bf16.msra.mxu0 %v282
    %348 = vmatprep.subr.bf16.mxu0 %v285
    %349 = vmatpush1.bf16.msra.mxu0 %v284
    %350 = vmatprep.subr.bf16.mxu0 %v287
    %351 = vmatpush1.bf16.msra.mxu0 %v286
    %352 = vmatprep.subr.bf16.mxu0 %v289
    %353 = vmatpush1.bf16.msra.mxu0 %v288
    %354 = vmatprep.subr.bf16.mxu0 %v291
    %355 = vmatpush1.bf16.msra.mxu0 %v290
    %356 = vmatprep.mubr.bf16.mxu0 %v131
    %357 = vmatmul.mubr.bf16.gmra.mrb[0].mxu0 %v130
    %v358 = vpop.f32.mrb[0].mxu0
    %v359 = vadd.f32 0.0, %v358
    %v360 = vpop.f32.mrb[0].mxu0
    %v361 = vadd.f32 0.0, %v360
    %v362 = vpop.f32.mrb[0].mxu0
    %v363 = vpop.f32.mrb[0].mxu0
    %364 = vdwg.mxu0
    %v365 = vmax.f32 %v359, %v361
    %v366 = vld [vmem:[#allocation5 + $0x8] sm:$0xff]
    %v367 = vld [vmem:[#allocation5 + $0x20] sm:$0xff]
    %v368 = vld [vmem:[#allocation5 + $0x38] sm:$0xff]
    %v369 = vld [vmem:[#allocation5 + $0x50] sm:$0xff]
    %v370 = vld [vmem:[#allocation5 + $0x68] sm:$0xff]
    %v371 = vld [vmem:[#allocation5 + $0x80] sm:$0xff]
    %v372 = vld [vmem:[#allocation5 + $0x98] sm:$0xff]
    %v373 = vld [vmem:[#allocation5 + $0xb0] sm:$0xff]
    %v374 = vld [vmem:[#allocation5 + $0xc8] sm:$0xff]
    %v375 = vld [vmem:[#allocation5 + $0xe0] sm:$0xff]
    %v376 = vld [vmem:[#allocation5 + $0xf8] sm:$0xff]
    %v377 = vld [vmem:[#allocation5 + $0x110] sm:$0xff]
    %v378 = vld [vmem:[#allocation5 + $0x128] sm:$0xff]
    %v379 = vld [vmem:[#allocation5 + $0x140] sm:$0xff]
    %v380 = vld [vmem:[#allocation5 + $0x158] sm:$0xff]
    %v381 = vld [vmem:[#allocation5 + $0x170] sm:$0xff]
    %v382 = vld [vmem:[#allocation5 + $0x188] sm:$0xff]
    %v383 = vld [vmem:[#allocation5 + $0x1a0] sm:$0xff]
    %v384 = vld [vmem:[#allocation5 + $0x1b8] sm:$0xff]
    %v385 = vld [vmem:[#allocation5 + $0x1d0] sm:$0xff]
    %v386 = vld [vmem:[#allocation5 + $0x1e8] sm:$0xff]
    %v387 = vld [vmem:[#allocation5 + $0x200] sm:$0xff]
    %v388 = vld [vmem:[#allocation5 + $0x218] sm:$0xff]
    %v389 = vld [vmem:[#allocation5 + $0x230] sm:$0xff]
    %v390 = vld [vmem:[#allocation5 + $0x248] sm:$0xff]
    %v391 = vld [vmem:[#allocation5 + $0x260] sm:$0xff]
    %v392 = vld [vmem:[#allocation5 + $0x278] sm:$0xff]
    %v393 = vld [vmem:[#allocation5 + $0x290] sm:$0xff]
    %v394 = vld [vmem:[#allocation5 + $0x2a8] sm:$0xff]
    %v395 = vld [vmem:[#allocation5 + $0x2c0] sm:$0xff]
    %v396 = vld [vmem:[#allocation5 + $0x2d8] sm:$0xff]
    %v397 = vld [vmem:[#allocation5 + $0x2f0] sm:$0xff]
    %v430 = vunpack.c.l.b16 %v366
    %v431 = vunpack.c.h.b16 %v366
    %v432 = vunpack.c.l.b16 %v367
    %v433 = vunpack.c.h.b16 %v367
    %v434 = vunpack.c.l.b16 %v368
    %v435 = vunpack.c.h.b16 %v368
    %v436 = vunpack.c.l.b16 %v369
    %v437 = vunpack.c.h.b16 %v369
    %v438 = vunpack.c.l.b16 %v370
    %v439 = vunpack.c.h.b16 %v370
    %v440 = vunpack.c.l.b16 %v371
    %v441 = vunpack.c.h.b16 %v371
    %v442 = vunpack.c.l.b16 %v372
    %v443 = vunpack.c.h.b16 %v372
    %v444 = vunpack.c.l.b16 %v373
    %v445 = vunpack.c.h.b16 %v373
    %v446 = vunpack.c.l.b16 %v374
    %v447 = vunpack.c.h.b16 %v374
    %v448 = vunpack.c.l.b16 %v375
    %v449 = vunpack.c.h.b16 %v375
    %v450 = vunpack.c.l.b16 %v376
    %v451 = vunpack.c.h.b16 %v376
    %v452 = vunpack.c.l.b16 %v377
    %v453 = vunpack.c.h.b16 %v377
    %v454 = vunpack.c.l.b16 %v378
    %v455 = vunpack.c.h.b16 %v378
    %v456 = vunpack.c.l.b16 %v379
    %v457 = vunpack.c.h.b16 %v379
    %v458 = vunpack.c.l.b16 %v380
    %v459 = vunpack.c.h.b16 %v380
    %v460 = vunpack.c.l.b16 %v381
    %v461 = vunpack.c.h.b16 %v381
    %v462 = vunpack.c.l.b16 %v382
    %v463 = vunpack.c.h.b16 %v382
    %v464 = vunpack.c.l.b16 %v383
    %v465 = vunpack.c.h.b16 %v383
    %v466 = vunpack.c.l.b16 %v384
    %v467 = vunpack.c.h.b16 %v384
    %v468 = vunpack.c.l.b16 %v385
    %v469 = vunpack.c.h.b16 %v385
    %v470 = vunpack.c.l.b16 %v386
    %v471 = vunpack.c.h.b16 %v386
    %v472 = vunpack.c.l.b16 %v387
    %v473 = vunpack.c.h.b16 %v387
    %v474 = vunpack.c.l.b16 %v388
    %v475 = vunpack.c.h.b16 %v388
    %v476 = vunpack.c.l.b16 %v389
    %v477 = vunpack.c.h.b16 %v389
    %v478 = vunpack.c.l.b16 %v390
    %v479 = vunpack.c.h.b16 %v390
    %v480 = vunpack.c.l.b16 %v391
    %v481 = vunpack.c.h.b16 %v391
    %v482 = vunpack.c.l.b16 %v392
    %v483 = vunpack.c.h.b16 %v392
    %v484 = vunpack.c.l.b16 %v393
    %v485 = vunpack.c.h.b16 %v393
    %v486 = vunpack.c.l.b16 %v394
    %v487 = vunpack.c.h.b16 %v394
    %v488 = vunpack.c.l.b16 %v395
    %v489 = vunpack.c.h.b16 %v395
    %v490 = vunpack.c.l.b16 %v396
    %v491 = vunpack.c.h.b16 %v396
    %v492 = vunpack.c.l.b16 %v397
    %v493 = vunpack.c.h.b16 %v397
    %v494 = vpack.c.b16 %v432, %v430
    %v495 = vpack.c.b16 %v433, %v431
    %v496 = vpack.c.b16 %v436, %v434
    %v497 = vpack.c.b16 %v437, %v435
    %v498 = vpack.c.b16 %v440, %v438
    %v499 = vpack.c.b16 %v441, %v439
    %v500 = vpack.c.b16 %v444, %v442
    %v501 = vpack.c.b16 %v445, %v443
    %v502 = vpack.c.b16 %v448, %v446
    %v503 = vpack.c.b16 %v449, %v447
    %v504 = vpack.c.b16 %v452, %v450
    %v505 = vpack.c.b16 %v453, %v451
    %v506 = vpack.c.b16 %v456, %v454
    %v507 = vpack.c.b16 %v457, %v455
    %v508 = vpack.c.b16 %v460, %v458
    %v509 = vpack.c.b16 %v461, %v459
    %v510 = vpack.c.b16 %v464, %v462
    %v511 = vpack.c.b16 %v465, %v463
    %v512 = vpack.c.b16 %v468, %v466
    %v513 = vpack.c.b16 %v469, %v467
    %v514 = vpack.c.b16 %v472, %v470
    %v515 = vpack.c.b16 %v473, %v471
    %v516 = vpack.c.b16 %v476, %v474
    %v517 = vpack.c.b16 %v477, %v475
    %v518 = vpack.c.b16 %v480, %v478
    %v519 = vpack.c.b16 %v481, %v479
    %v520 = vpack.c.b16 %v484, %v482
    %v521 = vpack.c.b16 %v485, %v483
    %v522 = vpack.c.b16 %v488, %v486
    %v523 = vpack.c.b16 %v489, %v487
    %v524 = vpack.c.b16 %v492, %v490
    %v525 = vpack.c.b16 %v493, %v491
    %558 = vmatprep.subr.bf16.mxu0 %v495
    %559 = vmatpush1.bf16.msra.mxu0 %v494
    %560 = vmatprep.subr.bf16.mxu0 %v497
    %561 = vmatpush1.bf16.msra.mxu0 %v496
    %562 = vmatprep.subr.bf16.mxu0 %v499
    %563 = vmatpush1.bf16.msra.mxu0 %v498
    %564 = vmatprep.subr.bf16.mxu0 %v501
    %565 = vmatpush1.bf16.msra.mxu0 %v500
    %566 = vmatprep.subr.bf16.mxu0 %v503
    %567 = vmatpush1.bf16.msra.mxu0 %v502
    %568 = vmatprep.subr.bf16.mxu0 %v505
    %569 = vmatpush1.bf16.msra.mxu0 %v504
    %570 = vmatprep.subr.bf16.mxu0 %v507
    %571 = vmatpush1.bf16.msra.mxu0 %v506
    %572 = vmatprep.subr.bf16.mxu0 %v509
    %573 = vmatpush1.bf16.msra.mxu0 %v508
    %574 = vmatprep.subr.bf16.mxu0 %v511
    %575 = vmatpush1.bf16.msra.mxu0 %v510
    %576 = vmatprep.subr.bf16.mxu0 %v513
    %577 = vmatpush1.bf16.msra.mxu0 %v512
    %578 = vmatprep.subr.bf16.mxu0 %v515
    %579 = vmatpush1.bf16.msra.mxu0 %v514
    %580 = vmatprep.subr.bf16.mxu0 %v517
    %581 = vmatpush1.bf16.msra.mxu0 %v516
    %582 = vmatprep.subr.bf16.mxu0 %v519
    %583 = vmatpush1.bf16.msra.mxu0 %v518
    %584 = vmatprep.subr.bf16.mxu0 %v521
    %585 = vmatpush1.bf16.msra.mxu0 %v520
    %586 = vmatprep.subr.bf16.mxu0 %v523
    %587 = vmatpush1.bf16.msra.mxu0 %v522
    %588 = vmatprep.subr.bf16.mxu0 %v525
    %589 = vmatpush1.bf16.msra.mxu0 %v524
    %590 = vmatprep.mubr.bf16.mxu0 %v131
    %591 = vmatmul.mubr.bf16.gmra.mrb[0].mxu0 %v130
    %v592 = vpop.f32.mrb[0].mxu0
    %v593 = vadd.f32 0.0, %v592
    %v594 = vpop.f32.mrb[0].mxu0
    %v595 = vadd.f32 0.0, %v594
    %v596 = vpop.f32.mrb[0].mxu0
    %v597 = vpop.f32.mrb[0].mxu0
    %598 = vdwg.mxu0
    %v599 = vmax.f32 %v593, %v595
    %v600 = vmax.f32 %v365, %v599
    %v601 = vld [vmem:[#allocation5 + $0x10] sm:$0xff]
    %v602 = vld [vmem:[#allocation5 + $0x28] sm:$0xff]
    %v603 = vld [vmem:[#allocation5 + $0x40] sm:$0xff]
    %v604 = vld [vmem:[#allocation5 + $0x58] sm:$0xff]
    %v605 = vld [vmem:[#allocation5 + $0x70] sm:$0xff]
    %v606 = vld [vmem:[#allocation5 + $0x88] sm:$0xff]
    %v607 = vld [vmem:[#allocation5 + $0xa0] sm:$0xff]
    %v608 = vld [vmem:[#allocation5 + $0xb8] sm:$0xff]
    %v609 = vld [vmem:[#allocation5 + $0xd0] sm:$0xff]
    %v610 = vld [vmem:[#allocation5 + $0xe8] sm:$0xff]
    %v611 = vld [vmem:[#allocation5 + $0x100] sm:$0xff]
    %v612 = vld [vmem:[#allocation5 + $0x118] sm:$0xff]
    %v613 = vld [vmem:[#allocation5 + $0x130] sm:$0xff]
    %v614 = vld [vmem:[#allocation5 + $0x148] sm:$0xff]
    %v615 = vld [vmem:[#allocation5 + $0x160] sm:$0xff]
    %v616 = vld [vmem:[#allocation5 + $0x178] sm:$0xff]
    %v617 = vld [vmem:[#allocation5 + $0x190] sm:$0xff]
    %v618 = vld [vmem:[#allocation5 + $0x1a8] sm:$0xff]
    %v619 = vld [vmem:[#allocation5 + $0x1c0] sm:$0xff]
    %v620 = vld [vmem:[#allocation5 + $0x1d8] sm:$0xff]
    %v621 = vld [vmem:[#allocation5 + $0x1f0] sm:$0xff]
    %v622 = vld [vmem:[#allocation5 + $0x208] sm:$0xff]
    %v623 = vld [vmem:[#allocation5 + $0x220] sm:$0xff]
    %v624 = vld [vmem:[#allocation5 + $0x238] sm:$0xff]
    %v625 = vld [vmem:[#allocation5 + $0x250] sm:$0xff]
    %v626 = vld [vmem:[#allocation5 + $0x268] sm:$0xff]
    %v627 = vld [vmem:[#allocation5 + $0x280] sm:$0xff]
    %v628 = vld [vmem:[#allocation5 + $0x298] sm:$0xff]
    %v629 = vld [vmem:[#allocation5 + $0x2b0] sm:$0xff]
    %v630 = vld [vmem:[#allocation5 + $0x2c8] sm:$0xff]
    %v631 = vld [vmem:[#allocation5 + $0x2e0] sm:$0xff]
    %v632 = vld [vmem:[#allocation5 + $0x2f8] sm:$0xff]
    %v665 = vunpack.c.l.b16 %v601
    %v666 = vunpack.c.h.b16 %v601
    %v667 = vunpack.c.l.b16 %v602
    %v668 = vunpack.c.h.b16 %v602
    %v669 = vunpack.c.l.b16 %v603
    %v670 = vunpack.c.h.b16 %v603
    %v671 = vunpack.c.l.b16 %v604
    %v672 = vunpack.c.h.b16 %v604
    %v673 = vunpack.c.l.b16 %v605
    %v674 = vunpack.c.h.b16 %v605
    %v675 = vunpack.c.l.b16 %v606
    %v676 = vunpack.c.h.b16 %v606
    %v677 = vunpack.c.l.b16 %v607
    %v678 = vunpack.c.h.b16 %v607
    %v679 = vunpack.c.l.b16 %v608
    %v680 = vunpack.c.h.b16 %v608
    %v681 = vunpack.c.l.b16 %v609
    %v682 = vunpack.c.h.b16 %v609
    %v683 = vunpack.c.l.b16 %v610
    %v684 = vunpack.c.h.b16 %v610
    %v685 = vunpack.c.l.b16 %v611
    %v686 = vunpack.c.h.b16 %v611
    %v687 = vunpack.c.l.b16 %v612
    %v688 = vunpack.c.h.b16 %v612
    %v689 = vunpack.c.l.b16 %v613
    %v690 = vunpack.c.h.b16 %v613
    %v691 = vunpack.c.l.b16 %v614
    %v692 = vunpack.c.h.b16 %v614
    %v693 = vunpack.c.l.b16 %v615
    %v694 = vunpack.c.h.b16 %v615
    %v695 = vunpack.c.l.b16 %v616
    %v696 = vunpack.c.h.b16 %v616
    %v697 = vunpack.c.l.b16 %v617
    %v698 = vunpack.c.h.b16 %v617
    %v699 = vunpack.c.l.b16 %v618
    %v700 = vunpack.c.h.b16 %v618
    %v701 = vunpack.c.l.b16 %v619
    %v702 = vunpack.c.h.b16 %v619
    %v703 = vunpack.c.l.b16 %v620
    %v704 = vunpack.c.h.b16 %v620
    %v705 = vunpack.c.l.b16 %v621
    %v706 = vunpack.c.h.b16 %v621
    %v707 = vunpack.c.l.b16 %v622
    %v708 = vunpack.c.h.b16 %v622
    %v709 = vunpack.c.l.b16 %v623
    %v710 = vunpack.c.h.b16 %v623
    %v711 = vunpack.c.l.b16 %v624
    %v712 = vunpack.c.h.b16 %v624
    %v713 = vunpack.c.l.b16 %v625
    %v714 = vunpack.c.h.b16 %v625
    %v715 = vunpack.c.l.b16 %v626
    %v716 = vunpack.c.h.b16 %v626
    %v717 = vunpack.c.l.b16 %v627
    %v718 = vunpack.c.h.b16 %v627
    %v719 = vunpack.c.l.b16 %v628
    %v720 = vunpack.c.h.b16 %v628
    %v721 = vunpack.c.l.b16 %v629
    %v722 = vunpack.c.h.b16 %v629
    %v723 = vunpack.c.l.b16 %v630
    %v724 = vunpack.c.h.b16 %v630
    %v725 = vunpack.c.l.b16 %v631
    %v726 = vunpack.c.h.b16 %v631
    %v727 = vunpack.c.l.b16 %v632
    %v728 = vunpack.c.h.b16 %v632
    %v729 = vpack.c.b16 %v667, %v665
    %v730 = vpack.c.b16 %v668, %v666
    %v731 = vpack.c.b16 %v671, %v669
    %v732 = vpack.c.b16 %v672, %v670
    %v733 = vpack.c.b16 %v675, %v673
    %v734 = vpack.c.b16 %v676, %v674
    %v735 = vpack.c.b16 %v679, %v677
    %v736 = vpack.c.b16 %v680, %v678
    %v737 = vpack.c.b16 %v683, %v681
    %v738 = vpack.c.b16 %v684, %v682
    %v739 = vpack.c.b16 %v687, %v685
    %v740 = vpack.c.b16 %v688, %v686
    %v741 = vpack.c.b16 %v691, %v689
    %v742 = vpack.c.b16 %v692, %v690
    %v743 = vpack.c.b16 %v695, %v693
    %v744 = vpack.c.b16 %v696, %v694
    %v745 = vpack.c.b16 %v699, %v697
    %v746 = vpack.c.b16 %v700, %v698
    %v747 = vpack.c.b16 %v703, %v701
    %v748 = vpack.c.b16 %v704, %v702
    %v749 = vpack.c.b16 %v707, %v705
    %v750 = vpack.c.b16 %v708, %v706
    %v751 = vpack.c.b16 %v711, %v709
    %v752 = vpack.c.b16 %v712, %v710
    %v753 = vpack.c.b16 %v715, %v713
    %v754 = vpack.c.b16 %v716, %v714
    %v755 = vpack.c.b16 %v719, %v717
    %v756 = vpack.c.b16 %v720, %v718
    %v757 = vpack.c.b16 %v723, %v721
    %v758 = vpack.c.b16 %v724, %v722
    %v759 = vpack.c.b16 %v727, %v725
    %v760 = vpack.c.b16 %v728, %v726
    %793 = vmatprep.subr.bf16.mxu0 %v730
    %794 = vmatpush1.bf16.msra.mxu0 %v729
    %795 = vmatprep.subr.bf16.mxu0 %v732
    %796 = vmatpush1.bf16.msra.mxu0 %v731
    %797 = vmatprep.subr.bf16.mxu0 %v734
    %798 = vmatpush1.bf16.msra.mxu0 %v733
    %799 = vmatprep.subr.bf16.mxu0 %v736
    %800 = vmatpush1.bf16.msra.mxu0 %v735
    %801 = vmatprep.subr.bf16.mxu0 %v738
    %802 = vmatpush1.bf16.msra.mxu0 %v737
    %803 = vmatprep.subr.bf16.mxu0 %v740
    %804 = vmatpush1.bf16.msra.mxu0 %v739
    %805 = vmatprep.subr.bf16.mxu0 %v742
    %806 = vmatpush1.bf16.msra.mxu0 %v741
    %807 = vmatprep.subr.bf16.mxu0 %v744
    %808 = vmatpush1.bf16.msra.mxu0 %v743
    %809 = vmatprep.subr.bf16.mxu0 %v746
    %810 = vmatpush1.bf16.msra.mxu0 %v745
    %811 = vmatprep.subr.bf16.mxu0 %v748
    %812 = vmatpush1.bf16.msra.mxu0 %v747
    %813 = vmatprep.subr.bf16.mxu0 %v750
    %814 = vmatpush1.bf16.msra.mxu0 %v749
    %815 = vmatprep.subr.bf16.mxu0 %v752
    %816 = vmatpush1.bf16.msra.mxu0 %v751
    %817 = vmatprep.subr.bf16.mxu0 %v754
    %818 = vmatpush1.bf16.msra.mxu0 %v753
    %819 = vmatprep.subr.bf16.mxu0 %v756
    %820 = vmatpush1.bf16.msra.mxu0 %v755
    %821 = vmatprep.subr.bf16.mxu0 %v758
    %822 = vmatpush1.bf16.msra.mxu0 %v757
    %823 = vmatprep.subr.bf16.mxu0 %v760
    %824 = vmatpush1.bf16.msra.mxu0 %v759
    %825 = vmatprep.mubr.bf16.mxu0 %v131
    %826 = vmatmul.mubr.bf16.gmra.mrb[0].mxu0 %v130
    %v827 = vpop.f32.mrb[0].mxu0
    %v828 = vadd.f32 0.0, %v827
    %v829 = vpop.f32.mrb[0].mxu0
    %v830 = vadd.f32 0.0, %v829
    %v831 = vpop.f32.mrb[0].mxu0
    %v832 = vpop.f32.mrb[0].mxu0
    %833 = vdwg.mxu0
    %v834 = vmax.f32 %v828, %v830
    %v835 = vmax.f32 %v600, %v834
    %v836 = vld [vmem:[%s2] sm:$0x1]
    %v838 = vlaneseq
    %v839 = vshrl.u32 %v838, 7
    %v840 = vsub.s32 0, %v839
    %v841 = vrot.slane %v836, %v840
    %v843 = vadd.f32 %v835, %v841
    %v844 = vmax.f32 %v843, 0.0
    %v845 = vpack.c.bf16 %v844, %v844
    %v846 = vld [vmem:[#allocation7] sm:$0xf]
    %v847 = vld [vmem:[#allocation7 + $0x4] sm:$0xf]
    %v848 = vld [vmem:[#allocation7 + $0x8] sm:$0xf]
    %v849 = vld [vmem:[#allocation7 + $0xc] sm:$0xf]
    %v850 = vld [vmem:[#allocation7 + $0x10] sm:$0xf]
    %v851 = vld [vmem:[#allocation7 + $0x14] sm:$0xf]
    %v852 = vld [vmem:[#allocation7 + $0x18] sm:$0xf]
    %v853 = vld [vmem:[#allocation7 + $0x1c] sm:$0xf]
    %v854 = vld [vmem:[#allocation7 + $0x20] sm:$0xf]
    %v855 = vld [vmem:[#allocation7 + $0x24] sm:$0xf]
    %v856 = vld [vmem:[#allocation7 + $0x28] sm:$0xf]
    %v857 = vld [vmem:[#allocation7 + $0x2c] sm:$0xf]
    %v858 = vld [vmem:[#allocation7 + $0x30] sm:$0xf]
    %v859 = vld [vmem:[#allocation7 + $0x34] sm:$0xf]
    %v860 = vld [vmem:[#allocation7 + $0x38] sm:$0xf]
    %v861 = vld [vmem:[#allocation7 + $0x3c] sm:$0xf]
    %v862 = vld [vmem:[%s4] sm:$0x1]
    %v864 = vlaneseq
    %v865 = vshrl.u32 %v864, 7
    %v866 = vsub.s32 0, %v865
    %v867 = vrot.slane %v862, %v866
    %v885 = vunpack.c.l.b16 %v846
    %v886 = vunpack.c.l.b16 %v847
    %v887 = vunpack.c.l.b16 %v848
    %v888 = vunpack.c.l.b16 %v849
    %v889 = vunpack.c.l.b16 %v850
    %v890 = vunpack.c.l.b16 %v851
    %v891 = vunpack.c.l.b16 %v852
    %v892 = vunpack.c.l.b16 %v853
    %v893 = vunpack.c.l.b16 %v854
    %v894 = vunpack.c.l.b16 %v855
    %v895 = vunpack.c.l.b16 %v856
    %v896 = vunpack.c.l.b16 %v857
    %v897 = vunpack.c.l.b16 %v858
    %v898 = vunpack.c.l.b16 %v859
    %v899 = vunpack.c.l.b16 %v860
    %v900 = vunpack.c.l.b16 %v861
    %v901 = vpack.c.b16 %v886, %v885
    %v902 = vpack.c.b16 %v888, %v887
    %v903 = vpack.c.b16 %v890, %v889
    %v904 = vpack.c.b16 %v892, %v891
    %v905 = vpack.c.b16 %v894, %v893
    %v906 = vpack.c.b16 %v896, %v895
    %v907 = vpack.c.b16 %v898, %v897
    %v908 = vpack.c.b16 %v900, %v899
    %917 = vmatprep.subr.bf16.mxu0 0
    %918 = vmatpush1.bf16.msra.mxu0 %v901
    %919 = vmatprep.subr.bf16.mxu0 0
    %920 = vmatpush1.bf16.msra.mxu0 %v902
    %921 = vmatprep.subr.bf16.mxu0 0
    %922 = vmatpush1.bf16.msra.mxu0 %v903
    %923 = vmatprep.subr.bf16.mxu0 0
    %924 = vmatpush1.bf16.msra.mxu0 %v904
    %925 = vmatprep.subr.bf16.mxu0 0
    %926 = vmatpush1.bf16.msra.mxu0 %v905
    %927 = vmatprep.subr.bf16.mxu0 0
    %928 = vmatpush1.bf16.msra.mxu0 %v906
    %929 = vmatprep.subr.bf16.mxu0 0
    %930 = vmatpush1.bf16.msra.mxu0 %v907
    %931 = vmatprep.subr.bf16.mxu0 0
    %932 = vmatpush1.bf16.msra.mxu0 %v908
    %933 = vmatprep.subr.bf16.mxu0 0
    %934 = vmatpush1.bf16.msra.mxu0 0
    %935 = vmatprep.subr.bf16.mxu0 0
    %936 = vmatpush1.bf16.msra.mxu0 0
    %937 = vmatprep.subr.bf16.mxu0 0
    %938 = vmatpush1.bf16.msra.mxu0 0
    %939 = vmatprep.subr.bf16.mxu0 0
    %940 = vmatpush1.bf16.msra.mxu0 0
    %941 = vmatprep.subr.bf16.mxu0 0
    %942 = vmatpush1.bf16.msra.mxu0 0
    %943 = vmatprep.subr.bf16.mxu0 0
    %944 = vmatpush1.bf16.msra.mxu0 0
    %945 = vmatprep.subr.bf16.mxu0 0
    %946 = vmatpush1.bf16.msra.mxu0 0
    %947 = vmatprep.subr.bf16.mxu0 0
    %948 = vmatpush1.bf16.msra.mxu0 0
    %949 = vmatprep.mubr.bf16.mxu0 0
    %950 = vmatmul.mubr.bf16.gmra.mrb[0].mxu0 %v845
    %v951 = vpop.f32.mrb[0].mxu0
    %v952 = vadd.f32 %v867, %v951
    %v953 = vpop.f32.mrb[0].mxu0
    %v954 = vpop.f32.mrb[0].mxu0
    %v955 = vpop.f32.mrb[0].mxu0
    %956 = vdwg.mxu0
    %957 = vst [vmem:[#allocation8] sm:$0xff] %v952
    // Predicated region
    $region34: #{tpu_custom_call.1} parent=1 // pred_check
      _
    $region35: #{tpu_custom_call.1} parent=1 // pred_check_branch
      %959 = sbr.rel (0) target = $region37
    $region36: #{tpu_custom_call.1} parent=1 // pred_region
      %s961 = ssub.s32 128, 128
      %962 = vsyncadd [#allocation4], %s961
      %s964 = sshll.u32 [#allocation8], 4
      %s965 = int_to_ptr.vmem [resolvable:$true] %s964
      %967 = dma.vmem_to_hbm [thread:$0]  %s965, 128, %s5, [#allocation4]
    $region37: #{tpu_custom_call.1} parent=1 // pred_fallthru
      _
    // Predicated region
    $region38: #{tpu_custom_call.1} parent=1 // pred_check
      _
    $region39: #{tpu_custom_call.1} parent=1 // pred_check_branch
      %969 = sbr.rel (0) target = $region41
    $region40: #{tpu_custom_call.1} parent=1 // pred_region
      %970 = dma.done [#allocation4], 128
    $region41: #{tpu_custom_call.1} parent=1 // pred_fallthru
      _
    %971 = vsyncpa [#allocation3], 1
    %972 = vsyncpa [#allocation6], 1
    %973 = vsyncpa [#allocation4], 1

</llo_original>
